<compile_context>
chip_gen: v7x
topology: tpu7x:2x2x1
jax: 0.10.0
libtpu: 0.0.40
codegen_flags: <defaults>
</compile_context>

<pallas_src>
import functools

import jax
import jax.numpy as jnp
from jax.experimental import pallas as pl
from jax.experimental.pallas import tpu as pltpu

ALPHA = 0.8
GAMMA = 2
LANES = 128


def _focal_bce_sum_kernel(x_ref, t_ref, acc_ref, *, total, tile_rows,
                          blocks_per_core):
    """Accumulates the sum of per-element BCE into a per-core (1,1,128) slab."""
    # Init this core's accumulator on its first reduction step.
    @pl.when(pl.program_id(1) == 0)
    def _():
        acc_ref[...] = jnp.zeros_like(acc_ref)

    # Logical block id (the DMA block index is clamped in the index_map; any
    # duplicated / out-of-range data is masked out below).
    block_id = pl.program_id(0) * blocks_per_core + pl.program_id(1)
    base = block_id * (tile_rows * LANES)

    x = x_ref[...].astype(jnp.float32)
    t = t_ref[...].astype(jnp.float32)

    # Global flat element index of every slot in this tile -> validity mask.
    # Covers lane padding, the partial tail tile and fully-clamped tiles.
    row_ids = jax.lax.broadcasted_iota(jnp.int32, (tile_rows, LANES), 0)
    col_ids = jax.lax.broadcasted_iota(jnp.int32, (tile_rows, LANES), 1)
    idx = base + row_ids * LANES + col_ids
    valid = idx < total

    # Numerically-stable log(sigmoid(x)) and log(1 - sigmoid(x)), clamped at
    # -100 exactly like torch.nn.functional.binary_cross_entropy.
    log1p_term = jnp.log(1.0 + jnp.exp(-jnp.abs(x)))        # log1p(exp(-|x|))
    log_p = jnp.maximum(-(jnp.maximum(-x, 0.0) + log1p_term), -100.0)
    log_1mp = jnp.maximum(-(jnp.maximum(x, 0.0) + log1p_term), -100.0)

    bce = -(t * log_p + (1.0 - t) * log_1mp)
    bce = jnp.where(valid, bce, 0.0)

    # Sublane-only reduction per step; lanes stay dense.  The single
    # cross-lane reduction happens once in the JAX epilogue.
    acc_ref[...] += bce.sum(axis=0, keepdims=True).reshape(1, 1, LANES)


def focal_loss(inputs, targets, alpha=ALPHA, gamma=GAMMA, smooth=1,
               block_rows=1024):
    """Pallas implementation of FocalLoss.forward (returns a scalar f32).

    `smooth` is accepted for signature parity with the PyTorch module but,
    exactly as in the original forward, it is unused.
    """
    del smooth
    total = inputs.size
    assert targets.size == total

    # Flatten at native dtype; the f32 cast happens inside the kernel so HBM
    # traffic stays at the input dtype width (bf16 logits, int8 targets, ...).
    x = inputs.reshape(-1)
    t = targets.reshape(-1)

    rows = pl.cdiv(total, LANES)
    lane_pad = rows * LANES - total
    if lane_pad:
        # <= 127 elements; padded values are masked out inside the kernel.
        x = jnp.pad(x, (0, lane_pad))
        t = jnp.pad(t, (0, lane_pad))

    x2 = x.reshape(rows, LANES)
    t2 = t.reshape(rows, LANES)

    # Big lane-dense tiles: (1024, 128) f32 = 512 KiB per input tile,
    # ~2 MiB with 2 inputs x double buffering -> fits the default scoped VMEM
    # budget on v5e / v6e / v7x.
    tile_rows = block_rows if rows >= block_rows else rows
    num_blocks = pl.cdiv(rows, tile_rows)

    # Leading "parallel" axis of size 2 -> both TensorCores on v7x.
    ncores = 2 if num_blocks >= 2 else 1
    blocks_per_core = pl.cdiv(num_blocks, ncores)
    last_block = num_blocks - 1

    def in_map(c, i):
        # Clamp so the DMA never starts fully outside the array; the kernel
        # masks any duplicated block by its logical element index.
        return (jnp.minimum(c * blocks_per_core + i, last_block), 0)

    kernel = functools.partial(
        _focal_bce_sum_kernel,
        total=total,
        tile_rows=tile_rows,
        blocks_per_core=blocks_per_core,
    )

    acc = pl.pallas_call(
        kernel,
        out_shape=jax.ShapeDtypeStruct((ncores, 1, LANES), jnp.float32),
        grid_spec=pltpu.PrefetchScalarGridSpec(
            num_scalar_prefetch=0,
            grid=(ncores, blocks_per_core),
            in_specs=[
                pl.BlockSpec((tile_rows, LANES), in_map),
                pl.BlockSpec((tile_rows, LANES), in_map),
            ],
            out_specs=pl.BlockSpec((1, 1, LANES), lambda c, i: (c, 0, 0)),
        ),
        compiler_params=pltpu.CompilerParams(
            dimension_semantics=("parallel", "arbitrary"),
        ),
    )(x2, t2)

    # O(1) scalar glue in plain JAX.
    bce_mean = jnp.sum(acc) / jnp.float32(total)
    bce_exp = jnp.exp(-bce_mean)
    return alpha * (1.0 - bce_exp) ** gamma * bce_mean


def _focal_loss_ref(inputs, targets, alpha=ALPHA, gamma=GAMMA):
    """Pure-JAX reference mirroring the PyTorch FocalLoss forward."""
    p = jnp.clip(jax.nn.sigmoid(inputs.astype(jnp.float32)), 0.0, 1.0).reshape(-1)
    t = targets.astype(jnp.float32).reshape(-1)
    log_p = jnp.maximum(jnp.log(p), -100.0)
    log_1mp = jnp.maximum(jnp.log(1.0 - p), -100.0)
    bce = jnp.mean(-(t * log_p + (1.0 - t) * log_1mp))
    bce_exp = jnp.exp(-bce)
    return alpha * (1.0 - bce_exp) ** gamma * bce


if __name__ == "__main__":
    key = jax.random.PRNGKey(0)
    k1, k2, k3, k4 = jax.random.split(key, 4)

    # Small NCHW logit map + binary targets, as the module implies.
    B, C, H, W = 2, 4, 16, 16
    x = jax.random.normal(k1, (B, C, H, W), dtype=jnp.float32)
    tgt = (jax.random.uniform(k2, (B, C, H, W)) > 0.5).astype(jnp.float32)

    loss = jax.block_until_ready(focal_loss(x, tgt))
    ref = _focal_loss_ref(x, tgt)
    assert jnp.allclose(loss, ref, atol=1e-5, rtol=1e-5), (loss, ref)

    # Second check: non-multiple-of-128 size + multi-block megacore split
    # (small block_rows just to exercise the tail-mask / clamp paths).
    x2 = jax.random.normal(k3, (2, 4, 100, 30), dtype=jnp.float32)
    t2 = (jax.random.uniform(k4, (2, 4, 100, 30)) > 0.5).astype(jnp.float32)
    loss2 = jax.block_until_ready(focal_loss(x2, t2, block_rows=40))
    ref2 = _focal_loss_ref(x2, t2)
    assert jnp.allclose(loss2, ref2, atol=1e-5, rtol=1e-5), (loss2, ref2)

    print("KERNEL_OK")
</pallas_src>

<mosaic_0001>
module attributes {stable_mosaic.version = 11 : i64} {
  func.func @_focal_bce_sum_kernel(%arg0: i32, %arg1: i32, %arg2: memref<16x128xf32, #tpu.memory_space<vmem>>, %arg3: memref<16x128xf32, #tpu.memory_space<vmem>>, %arg4: memref<1x1x128xf32, #tpu.memory_space<vmem>>) attributes {dimension_semantics = [#tpu.dimension_semantics<parallel>, #tpu.dimension_semantics<arbitrary>], iteration_bounds = array<i64: 1, 1>, scalar_prefetch = 0 : i64, scratch_operands = 0 : i64, tpu.core_type = #tpu.core_type<tc>, window_params = [{transform_indices = @transform_0, window_bounds = array<i64: 16, 128>}, {transform_indices = @transform_1, window_bounds = array<i64: 16, 128>}, {transform_indices = @transform_2, window_bounds = array<i64: 1, 1, 128>}]} {
    %c0_i32 = arith.constant 0 : i32
    %0 = arith.cmpi eq, %arg1, %c0_i32 : i32
    %1 = arith.extui %0 : i1 to i32
    %c0_i32_0 = arith.constant 0 : i32
    %2 = arith.cmpi ne, %1, %c0_i32_0 : i32
    scf.if %2 {
      %cst_23 = arith.constant 0.000000e+00 : f32
      %55 = vector.broadcast %cst_23 : f32 to vector<1x1x128xf32>
      %c0_24 = arith.constant 0 : index
      %c0_25 = arith.constant 0 : index
      %c0_26 = arith.constant 0 : index
      %56 = vector.load %arg4[%c0_24, %c0_25, %c0_26] : memref<1x1x128xf32, #tpu.memory_space<vmem>>, vector<1x1x128xf32>
      tpu.vector_store %arg4[%c0_24, %c0_25, %c0_26], %55 {strides = array<i32>} : memref<1x1x128xf32, #tpu.memory_space<vmem>>, vector<1x1x128xf32>,
    } else {
    }
    %c1_i32 = arith.constant 1 : i32
    %3 = arith.muli %arg0, %c1_i32 : i32
    %4 = arith.addi %3, %arg1 : i32
    %c2048_i32 = arith.constant 2048 : i32
    %5 = arith.muli %4, %c2048_i32 : i32
    %c0 = arith.constant 0 : index
    %c0_1 = arith.constant 0 : index
    %6 = vector.load %arg2[%c0, %c0_1] : memref<16x128xf32, #tpu.memory_space<vmem>>, vector<16x128xf32>
    %c0_2 = arith.constant 0 : index
    %c0_3 = arith.constant 0 : index
    %7 = vector.load %arg3[%c0_2, %c0_3] : memref<16x128xf32, #tpu.memory_space<vmem>>, vector<16x128xf32>
    %8 = tpu.iota {dimensions = array<i32: 0>} : vector<16x128xi32>
    %9 = tpu.iota {dimensions = array<i32: 1>} : vector<16x128xi32>
    %c128_i32 = arith.constant 128 : i32
    %10 = vector.broadcast %c128_i32 : i32 to vector<16x128xi32>
    %11 = arith.muli %8, %10 : vector<16x128xi32>
    %12 = vector.broadcast %5 : i32 to vector<16x128xi32>
    %13 = arith.addi %12, %11 : vector<16x128xi32>
    %14 = arith.addi %13, %9 : vector<16x128xi32>
    %c2048_i32_4 = arith.constant 2048 : i32
    %15 = vector.broadcast %c2048_i32_4 : i32 to vector<16x128xi32>
    %16 = arith.cmpi slt, %14, %15 : vector<16x128xi32>
    %17 = math.absf %6 : vector<16x128xf32>
    %cst = arith.constant 0.000000e+00 : f32
    %18 = vector.broadcast %cst : f32 to vector<16x128xf32>
    %19 = arith.subf %18, %17 : vector<16x128xf32>
    %20 = math.exp %19 : vector<16x128xf32>
    %cst_5 = arith.constant 1.000000e+00 : f32
    %21 = vector.broadcast %cst_5 : f32 to vector<16x128xf32>
    %22 = arith.addf %21, %20 : vector<16x128xf32>
    %23 = math.log %22 : vector<16x128xf32>
    %cst_6 = arith.constant 0.000000e+00 : f32
    %24 = vector.broadcast %cst_6 : f32 to vector<16x128xf32>
    %25 = arith.subf %24, %6 : vector<16x128xf32>
    %cst_7 = arith.constant 0.000000e+00 : f32
    %26 = vector.broadcast %cst_7 : f32 to vector<16x128xf32>
    %27 = arith.maximumf %25, %26 : vector<16x128xf32>
    %28 = arith.addf %27, %23 : vector<16x128xf32>
    %cst_8 = arith.constant 0.000000e+00 : f32
    %29 = vector.broadcast %cst_8 : f32 to vector<16x128xf32>
    %30 = arith.subf %29, %28 : vector<16x128xf32>
    %cst_9 = arith.constant -1.000000e+02 : f32
    %31 = vector.broadcast %cst_9 : f32 to vector<16x128xf32>
    %32 = arith.maximumf %30, %31 : vector<16x128xf32>
    %cst_10 = arith.constant 0.000000e+00 : f32
    %33 = vector.broadcast %cst_10 : f32 to vector<16x128xf32>
    %34 = arith.maximumf %6, %33 : vector<16x128xf32>
    %35 = arith.addf %34, %23 : vector<16x128xf32>
    %cst_11 = arith.constant 0.000000e+00 : f32
    %36 = vector.broadcast %cst_11 : f32 to vector<16x128xf32>
    %37 = arith.subf %36, %35 : vector<16x128xf32>
    %cst_12 = arith.constant -1.000000e+02 : f32
    %38 = vector.broadcast %cst_12 : f32 to vector<16x128xf32>
    %39 = arith.maximumf %37, %38 : vector<16x128xf32>
    %40 = arith.mulf %7, %32 : vector<16x128xf32>
    %cst_13 = arith.constant 1.000000e+00 : f32
    %41 = vector.broadcast %cst_13 : f32 to vector<16x128xf32>
    %42 = arith.subf %41, %7 : vector<16x128xf32>
    %43 = arith.mulf %42, %39 : vector<16x128xf32>
    %44 = arith.addf %40, %43 : vector<16x128xf32>
    %cst_14 = arith.constant 0.000000e+00 : f32
    %45 = vector.broadcast %cst_14 : f32 to vector<16x128xf32>
    %46 = arith.subf %45, %44 : vector<16x128xf32>
    %cst_15 = arith.constant 0.000000e+00 : f32
    %47 = vector.broadcast %cst_15 : f32 to vector<16x128xf32>
    %48 = arith.select %16, %46, %47 : vector<16x128xi1>, vector<16x128xf32>
    %c0_16 = arith.constant 0 : index
    %c0_17 = arith.constant 0 : index
    %c0_18 = arith.constant 0 : index
    %49 = vector.load %arg4[%c0_16, %c0_17, %c0_18] : memref<1x1x128xf32, #tpu.memory_space<vmem>>, vector<1x1x128xf32>
    %cst_19 = arith.constant dense<0.000000e+00> : vector<128xf32>
    %50 = vector.multi_reduction <add>, %48, %cst_19 [0] : vector<16x128xf32> to vector<128xf32>
    %51 = vector.shape_cast %50 : vector<128xf32> to vector<1x128xf32>
    %52 = vector.shape_cast %51 : vector<1x128xf32> to vector<1x1x128xf32>
    %53 = arith.addf %49, %52 : vector<1x1x128xf32>
    %c0_20 = arith.constant 0 : index
    %c0_21 = arith.constant 0 : index
    %c0_22 = arith.constant 0 : index
    %54 = vector.load %arg4[%c0_20, %c0_21, %c0_22] : memref<1x1x128xf32, #tpu.memory_space<vmem>>, vector<1x1x128xf32>
    tpu.vector_store %arg4[%c0_20, %c0_21, %c0_22], %53 {strides = array<i32>} : memref<1x1x128xf32, #tpu.memory_space<vmem>>, vector<1x1x128xf32>,
    return
  }
  func.func @transform_0(%arg0: i32, %arg1: i32) -> (i32, i32) {
    %c1_i32 = arith.constant 1 : i32
    %0 = arith.muli %arg0, %c1_i32 : i32
    %1 = arith.addi %0, %arg1 : i32
    %c0_i32 = arith.constant 0 : i32
    %2 = arith.minsi %1, %c0_i32 : i32
    %c0_i32_0 = arith.constant 0 : i32
    %c0_i32_1 = arith.constant 0 : i32
    return %2, %c0_i32_0 : i32, i32
  }
  func.func @transform_1(%arg0: i32, %arg1: i32) -> (i32, i32) {
    %c1_i32 = arith.constant 1 : i32
    %0 = arith.muli %arg0, %c1_i32 : i32
    %1 = arith.addi %0, %arg1 : i32
    %c0_i32 = arith.constant 0 : i32
    %2 = arith.minsi %1, %c0_i32 : i32
    %c0_i32_0 = arith.constant 0 : i32
    %c0_i32_1 = arith.constant 0 : i32
    return %2, %c0_i32_0 : i32, i32
  }
  func.func @transform_2(%arg0: i32, %arg1: i32) -> (i32, i32, i32) {
    %c0_i32 = arith.constant 0 : i32
    %c0_i32_0 = arith.constant 0 : i32
    %c0_i32_1 = arith.constant 0 : i32
    return %arg0, %c0_i32, %c0_i32_0 : i32, i32, i32
  }
}

</mosaic_0001>

<llo_original>
// kernel: tpu_custom_call.1
$region0: #{tpu_custom_call.1}
  #allocation0 [shape = 'u32[]', space=smem, size = 0x4, offset = 0x4, fixed_abs, tag = 'smem constant byte address 0x4 - core index']
  #allocation1 [shape = 'u32[144,128]{1,0:T(1,128)}', space=vmem, size = 0x12000, scoped, tag = 'internal scratch']
  %s0 = inlined_call_operand.hbm [shape: f32[16,128], index: 0, kind: input, shape index: {}]
  %s1 = inlined_call_operand.hbm [shape: f32[16,128], index: 1, kind: input, shape index: {}]
  %s2 = inlined_call_operand.hbm [shape: f32[1,1,128], index: 2, kind: output, shape index: {}]
  %s3 = sld [smem:[#allocation0]]
  $region30: #{tpu_custom_call.1} parent=0
    _
  %s5 = ssub.s32 1, %s3
  %s6 = scalar_select 0, %s5, %s3
  $region1: #{tpu_custom_call.1} parent=0
    #allocation2 [shape = 'u8[8192]{0}', space=vmem, size = 0x2000, scoped, tag = 'input window, operand 0, single buffered']
    #allocation3 [shape = 's32[1]{0}', space=sflag, size = 0x4, scoped, tag = 'scoped memory for tpu_custom_call.1']
    #allocation4 [shape = 's32[1]{0}', space=sflag, size = 0x4, scoped, tag = 'scoped memory for tpu_custom_call.1']
    #allocation5 [shape = 'u8[8192]{0}', space=vmem, size = 0x2000, scoped, tag = 'input window, operand 1, single buffered']
    #allocation6 [shape = 's32[1]{0}', space=sflag, size = 0x4, scoped, tag = 'scoped memory for tpu_custom_call.1']
    #allocation7 [shape = 'u8[512]{0}', space=vmem, size = 0x400, scoped, tag = 'output window, operand 0, single buffered']
    %7 = vsyncpa [#allocation3], 0
    %8 = vsyncpa [#allocation6], 0
    %9 = vsyncpa [#allocation4], 0
    // Predicated region
    $region2: #{tpu_custom_call.1} parent=1 // pred_check
      _
    $region3: #{tpu_custom_call.1} parent=1 // pred_check_branch
      %11 = sbr.rel (0) target = $region5
    $region4: #{tpu_custom_call.1} parent=1 // pred_region
      %s12 = sadd.s32 0, 0
      %p13 = scmp.lt.s32.totalorder %s12, 0
      %s14 = scalar_select %p13, %s12, 0
      %s15 = smul.u32 2, %s14
      %s17 = ssub.s32 256, 256
      %18 = vsyncadd [#allocation3], %s17
      %s19 = smul.addr %s15, 128
      %s20 = scalar_lea.hbm %s0, %s19
      %s21 = sshll.u32 [#allocation2], 4
      %s22 = int_to_ptr.vmem [resolvable:$true] %s21
      %27 = dma.hbm_to_vmem [thread:$0]  %s20, 256, %s22, [#allocation3], 128, 128, 8
    $region5: #{tpu_custom_call.1} parent=1 // pred_fallthru
      _
    // Predicated region
    $region6: #{tpu_custom_call.1} parent=1 // pred_check
      _
    $region7: #{tpu_custom_call.1} parent=1 // pred_check_branch
      %29 = sbr.rel (0) target = $region9
    $region8: #{tpu_custom_call.1} parent=1 // pred_region
      %s30 = sadd.s32 0, 0
      %p31 = scmp.lt.s32.totalorder %s30, 0
      %s32 = scalar_select %p31, %s30, 0
      %s33 = smul.u32 2, %s32
      %s35 = ssub.s32 256, 256
      %36 = vsyncadd [#allocation6], %s35
      %s37 = smul.addr %s33, 128
      %s38 = scalar_lea.hbm %s1, %s37
      %s39 = sshll.u32 [#allocation5], 4
      %s40 = int_to_ptr.vmem [resolvable:$true] %s39
      %45 = dma.hbm_to_vmem [thread:$0]  %s38, 256, %s40, [#allocation6], 128, 128, 8
    $region9: #{tpu_custom_call.1} parent=1 // pred_fallthru
      _
    // Predicated region
    $region10: #{tpu_custom_call.1} parent=1 // pred_check
      _
    $region11: #{tpu_custom_call.1} parent=1 // pred_check_branch
      %47 = sbr.rel (0) target = $region13
    $region12: #{tpu_custom_call.1} parent=1 // pred_region
      %48 = dma.done [#allocation3], 256
    $region13: #{tpu_custom_call.1} parent=1 // pred_fallthru
      _
    // Predicated region
    $region14: #{tpu_custom_call.1} parent=1 // pred_check
      _
    $region15: #{tpu_custom_call.1} parent=1 // pred_check_branch
      %50 = sbr.rel (0) target = $region17
    $region16: #{tpu_custom_call.1} parent=1 // pred_region
      %51 = dma.done [#allocation6], 256
    $region17: #{tpu_custom_call.1} parent=1 // pred_fallthru
      _
    %s52 = sadd.s32 0, 0
    %p53 = scmp.lt.s32.totalorder %s52, 0
    %s54 = scalar_select %p53, %s52, 0
    %s55 = smul.u32 2, %s54
    %s56 = sadd.s32 0, 0
    %p57 = scmp.lt.s32.totalorder %s56, 0
    %s58 = scalar_select %p57, %s56, 0
    %s59 = smul.u32 2, %s58
    %p60 = scmp.eq.s32.totalorder 0, 0
    // Predicated region
    $region18: #{tpu_custom_call.1} parent=1 // pred_check
      %p61 = pneg %p60
    $region19: #{tpu_custom_call.1} parent=1 // pred_check_branch
      %63 = sbr.rel (%p61) target = $region21
    $region20: #{tpu_custom_call.1} parent=1 // pred_region
      %64 = vst [vmem:[#allocation7] sm:$0x1] 0.0
    $region21: #{tpu_custom_call.1} parent=1 // pred_fallthru
      _
    %s65 = sadd.s32 0, 0
    %s66 = smul.u32 %s65, 2048
    %v67 = vld [vmem:[#allocation2] sm:$0xff]
    %v68 = vld [vmem:[#allocation2 + $0x8] sm:$0xff]
    %v69 = vld [vmem:[#allocation5] sm:$0xff]
    %v70 = vld [vmem:[#allocation5 + $0x8] sm:$0xff]
    %v71 = vlaneseq
    %v72 = vshrl.u32 %v71, 7
    %v73 = vadd.s32 %v72, 8
    %v74 = vlaneseq
    %v75 = vand.u32 %v74, 127
    %v76 = vmul.u32 %v72, 128
    %v77 = vmul.u32 %v73, 128
    %v78 = vstv %s66
    %v79 = vadd.s32 %v78, %v76
    %v80 = vadd.s32 %v78, %v77
    %v81 = vadd.s32 %v79, %v75
    %v82 = vadd.s32 %v80, %v75
    %vm83 = vcmp.lt.s32.totalorder %v81, 2048
    %vm84 = vcmp.lt.s32.totalorder %v82, 2048
    %v85 = vand.u32 2147483647, %v67
    %v86 = vand.u32 2147483647, %v68
    %v87 = vsub.f32 0.0, %v85
    %v88 = vsub.f32 0.0, %v86
    %v89 = vmul.f32 %v87, 1.442695
    %v90 = vpow.pop %v89
    %v91 = vmul.f32 %v88, 1.442695
    %v92 = vpow.pop %v91
    %v93 = vadd.f32 %v90, 1.0
    %v94 = vadd.f32 %v92, 1.0
    %v95 = vlog2.pop %v93
    %v96 = vmul.f32 %v95, 0.6931472
    %v97 = vlog2.pop %v94
    %v98 = vmul.f32 %v97, 0.6931472
    %v99 = vsub.f32 0.0, %v67
    %v100 = vsub.f32 0.0, %v68
    %v101 = vmax.f32 %v99, 0.0
    %v102 = vmax.f32 %v100, 0.0
    %v103 = vadd.f32 %v101, %v96
    %v104 = vadd.f32 %v102, %v98
    %v105 = vsub.f32 0.0, %v103
    %v106 = vsub.f32 0.0, %v104
    %v107 = vmax.f32 %v105, -100.0
    %v108 = vmax.f32 %v106, -100.0
    %v109 = vmax.f32 %v67, 0.0
    %v110 = vmax.f32 %v68, 0.0
    %v111 = vadd.f32 %v109, %v96
    %v112 = vadd.f32 %v110, %v98
    %v113 = vsub.f32 0.0, %v111
    %v114 = vsub.f32 0.0, %v112
    %v115 = vmax.f32 %v113, -100.0
    %v116 = vmax.f32 %v114, -100.0
    %v117 = vmul.f32 %v69, %v107
    %v118 = vmul.f32 %v70, %v108
    %v119 = vsub.f32 1.0, %v69
    %v120 = vsub.f32 1.0, %v70
    %v121 = vmul.f32 %v119, %v115
    %v122 = vmul.f32 %v120, %v116
    %v123 = vadd.f32 %v117, %v121
    %v124 = vadd.f32 %v118, %v122
    %v125 = vsub.f32 0.0, %v123
    %v126 = vsub.f32 0.0, %v124
    %v127 = vsel %vm83, %v125, 0.0
    %v128 = vsel %vm84, %v126, 0.0
    %v129 = vld [vmem:[#allocation7] sm:$0x1]
    %v130 = vadd.f32 %v127, %v128
    %v131 = vrot.slane %v130, 4
    %v132 = vadd.f32 %v130, %v131
    %v133 = vrot.slane %v132, 2
    %v134 = vadd.f32 %v132, %v133
    %v135 = vrot.slane %v134, 1
    %v136 = vadd.f32 %v134, %v135
    %v137 = vadd.f32 %v129, %v136
    %138 = vst [vmem:[#allocation7] sm:$0x1] %v137
    // Predicated region
    $region22: #{tpu_custom_call.1} parent=1 // pred_check
      _
    $region23: #{tpu_custom_call.1} parent=1 // pred_check_branch
      %140 = sbr.rel (0) target = $region25
    $region24: #{tpu_custom_call.1} parent=1 // pred_region
      %s142 = ssub.s32 16, 16
      %143 = vsyncadd [#allocation4], %s142
      %s145 = sshll.u32 [#allocation7], 4
      %s146 = int_to_ptr.vmem [resolvable:$true] %s145
      %148 = dma.vmem_to_hbm [thread:$0]  %s146, 16, %s2, [#allocation4]
    $region25: #{tpu_custom_call.1} parent=1 // pred_fallthru
      _
    // Predicated region
    $region26: #{tpu_custom_call.1} parent=1 // pred_check
      _
    $region27: #{tpu_custom_call.1} parent=1 // pred_check_branch
      %150 = sbr.rel (0) target = $region29
    $region28: #{tpu_custom_call.1} parent=1 // pred_region
      %151 = dma.done [#allocation4], 16
    $region29: #{tpu_custom_call.1} parent=1 // pred_fallthru
      _
    %152 = vsyncpa [#allocation3], 1
    %153 = vsyncpa [#allocation6], 1
    %154 = vsyncpa [#allocation4], 1

</llo_original>
